<compile_context>
chip_gen: v6e
topology: v6e:2x2x1
jax: 0.10.0
libtpu: 0.0.40
codegen_flags: <defaults>
</compile_context>

<pallas_src>
import functools

import jax
import jax.numpy as jnp
from jax.experimental import pallas as pl
from jax.experimental.pallas import tpu as pltpu


def _round_up(x, m):
    return (x + m - 1) // m * m


def _cdiv(a, b):
    return (a + b - 1) // b


def _choose_batch_tile(B):
    # Large, lane-aligned tiles (multiple of 128); keep >=2 grid steps when the
    # batch allows so both v7x TensorCores get work under "parallel" semantics.
    # Cap at 2048 so double-buffered inputs + f32 intermediates stay comfortably
    # inside v5e's 16 MiB default scoped-VMEM limit (v6e/v7x have more headroom).
    if B <= 256:
        return 128
    return min(2048, _round_up(_cdiv(B, 2), 128))


def pack_params(params):
    """One-time packing of (W [in,out], b [1,out]) params into kernel buffers.

    Returns:
      w_packed: bf16 [n_hidden*P, P] — hidden-layer weights, each zero-padded to
                [P, P].  For layers >= 1 the bias is folded into row P-1 (the
                activation carries a constant 1.0 in lane P-1) and [P-1, P-1] = 1.0
                keeps that ones-lane propagating through ReLU.
      tail:     f32 [8, P] — row 0: layer-0 bias with 1.0 at lane P-1 (injects the
                ones lane); row 1: final-layer weight as a row with b_last at
                lane P-1; remaining rows zero.
    All padding lanes are zero, so padded activation lanes stay exactly zero.
    """
    n_hidden = len(params) - 1
    feat_dims = [params[0][0].shape[0]] + [w.shape[1] for (w, _) in params[:n_hidden]]
    # +1 guarantees lane P-1 is never a real feature lane (reserved "ones" lane).
    P = _round_up(max(feat_dims) + 1, 128)

    blocks = []
    for l, (w, b) in enumerate(params[:n_hidden]):
        blk = jnp.zeros((P, P), jnp.float32)
        blk = blk.at[: w.shape[0], : w.shape[1]].set(w)
        if l > 0:
            # Fold the bias into the MXU contraction via the ones lane.
            blk = blk.at[P - 1, : b.shape[1]].set(b.reshape(-1))
            blk = blk.at[P - 1, P - 1].set(1.0)  # keep the ones lane alive
        blocks.append(blk)
    w_packed = jnp.concatenate(blocks, axis=0).astype(jnp.bfloat16)

    tail = jnp.zeros((8, P), jnp.float32)
    b0 = params[0][1].reshape(-1)
    tail = tail.at[0, : b0.shape[0]].set(b0)
    tail = tail.at[0, P - 1].set(1.0)            # inject the ones lane after layer 0
    w_last, b_last = params[-1]
    tail = tail.at[1, : w_last.shape[0]].set(w_last[:, 0])
    tail = tail.at[1, P - 1].set(b_last.reshape(()))
    return w_packed, tail


def _make_kernel(P, n_hidden, input_dim):
    def kernel(x_ref, w_ref, tail_ref, o_ref):
        # x arrives un-padded in the feature dim; cast to bf16 for the MXU.
        x = x_ref[...].astype(jnp.bfloat16)                       # [tile, input_dim]
        # Layer 0: K = input_dim; bias (+ the constant-1.0 lane) added in f32.
        a = jnp.dot(x, w_ref[0:input_dim, :],
                    preferred_element_type=jnp.float32)           # [tile, P]
        h = jnp.maximum(a + tail_ref[0:1, :], 0.0).astype(jnp.bfloat16)
        # Layers 1..n_hidden-1: bias folded into weight row P-1 (ones lane), so the
        # epilogue is just ReLU + bf16 cast.
        for l in range(1, n_hidden):
            a = jnp.dot(h, w_ref[l * P:(l + 1) * P, :],
                        preferred_element_type=jnp.float32)
            h = jnp.maximum(a, 0.0).astype(jnp.bfloat16)
        # Final layer (out_dim == 1), computed lane-dense: [1,P] x [tile,P]^T -> [1,tile].
        # This is the flash-attention q.k^T pattern (contract last dims): the MXU's
        # transposed stationary-push path handles it without materializing h^T.
        # b_last is folded via the ones lane (tail[1, P-1]).
        w_last = tail_ref[1:2, :].astype(jnp.bfloat16)
        y = jax.lax.dot_general(w_last, h, (((1,), (1,)), ((), ())),
                                preferred_element_type=jnp.float32)  # [1, tile]
        o_ref[...] = y.astype(o_ref.dtype)

    return kernel


@functools.partial(jax.jit, static_argnames=("batch_tile",))
def bigger_network_forward(x, w_packed, tail, *, batch_tile=None):
    """x: [B, input_dim] f32.  w_packed/tail: outputs of pack_params (packed once)."""
    B, input_dim = x.shape
    P = w_packed.shape[1]
    n_hidden = w_packed.shape[0] // P

    if batch_tile is None:
        batch_tile = _choose_batch_tile(B)
    batch_tile = _round_up(batch_tile, 128)      # keep output lane blocks unmasked
    B_pad = _round_up(B, batch_tile)
    if B_pad != B:
        x = jnp.pad(x, ((0, B_pad - B), (0, 0)))  # batch-only pad; no feature pad/cast
    grid = B_pad // batch_tile

    out = pl.pallas_call(
        _make_kernel(P, n_hidden, input_dim),
        out_shape=jax.ShapeDtypeStruct((1, B_pad), jnp.float32),
        grid_spec=pltpu.PrefetchScalarGridSpec(
            num_scalar_prefetch=0,
            grid=(grid,),
            in_specs=[
                # x tile: last dim equals the full array last dim -> legal block.
                pl.BlockSpec((batch_tile, input_dim), lambda i: (i, 0)),
                # Packed hidden-layer weights, constant index map -> VMEM-resident.
                pl.BlockSpec((n_hidden * P, P), lambda i: (0, 0)),
                # Layer-0 bias + final-layer weight row (tiny, resident).
                pl.BlockSpec((8, P), lambda i: (0, 0)),
            ],
            out_specs=pl.BlockSpec((1, batch_tile), lambda i: (0, i)),  # lane-dense row
        ),
        compiler_params=pltpu.CompilerParams(
            dimension_semantics=("parallel",),
        ),
    )(x, w_packed, tail)

    return out.reshape(B_pad, 1)[:B].astype(x.dtype)


def init_params(key, input_dim, layer0, layer1, layer2, layer3):
    """Deterministic init mirroring nn.Linear shapes (stored transposed: [in, out])."""
    dims = [(input_dim, layer0), (layer0, layer1), (layer1, layer2),
            (layer2, layer3), (layer3, 1)]
    params = []
    for (fan_in, fan_out) in dims:
        key, kw, kb = jax.random.split(key, 3)
        bound = 1.0 / jnp.sqrt(fan_in)
        w = jax.random.uniform(kw, (fan_in, fan_out), jnp.float32, -bound, bound)
        b = jax.random.uniform(kb, (1, fan_out), jnp.float32, -bound, bound)
        params.append((w, b))
    return params


def reference_forward_f32(x, params):
    h = x
    for i, (w, b) in enumerate(params):
        h = h @ w + b
        if i < len(params) - 1:
            h = jnp.maximum(h, 0.0)
    return h


def reference_forward_matched(x, params):
    """Same precision recipe as the kernel: bf16 operands, f32 accumulate; layer-0
    bias added in f32, later biases enter as bf16 values (folded into the MXU)."""
    n_hidden = len(params) - 1
    h = x.astype(jnp.bfloat16)
    for i, (w, b) in enumerate(params):
        a = jnp.dot(h, w.astype(jnp.bfloat16),
                    preferred_element_type=jnp.float32)
        if i == 0:
            a = a + b
        else:
            a = a + b.astype(jnp.bfloat16).astype(jnp.float32)
        if i < n_hidden:
            h = jnp.maximum(a, 0.0).astype(jnp.bfloat16)
        else:
            h = a
    return h


def _check(B, key, input_dim=32, layer0=64, layer1=64, layer2=32, layer3=32):
    k_x, k_p = jax.random.split(key)
    x = jax.random.normal(k_x, (B, input_dim), jnp.float32)
    params = init_params(k_p, input_dim, layer0, layer1, layer2, layer3)
    w_packed, tail = pack_params(params)   # packed once, outside the forward path

    out = jax.block_until_ready(bigger_network_forward(x, w_packed, tail))
    assert out.shape == (B, 1)

    ref_m = reference_forward_matched(x, params)
    ref_f32 = reference_forward_f32(x, params)
    assert jnp.allclose(out, ref_m, atol=5e-3, rtol=5e-3), "mismatch vs matched-precision reference"
    assert jnp.allclose(out, ref_f32, atol=3e-2, rtol=3e-2), "mismatch vs f32 reference"


if __name__ == "__main__":
    key = jax.random.PRNGKey(0)
    k0, k1 = jax.random.split(key)

    # Small demo shapes consistent with the module.
    _check(16, k0)
    # Exercise the multi-tile (>=2 parallel grid steps) path as well.
    _check(512, k1)

    print("KERNEL_OK")
</pallas_src>

<mosaic_0001>
module attributes {stable_mosaic.version = 11 : i64} {
  func.func @kernel(%arg0: i32, %arg1: memref<128x32xf32, #tpu.memory_space<vmem>>, %arg2: memref<512x128xbf16, #tpu.memory_space<vmem>>, %arg3: memref<8x128xf32, #tpu.memory_space<vmem>>, %arg4: memref<1x128xf32, #tpu.memory_space<vmem>>) attributes {dimension_semantics = [#tpu.dimension_semantics<parallel>], iteration_bounds = array<i64: 1>, scalar_prefetch = 0 : i64, scratch_operands = 0 : i64, tpu.core_type = #tpu.core_type<tc>, window_params = [{transform_indices = @transform_0, window_bounds = array<i64: 128, 32>}, {pipeline_mode = #tpu.pipeline_mode<synchronous>, transform_indices = @transform_1, window_bounds = array<i64: 512, 128>}, {pipeline_mode = #tpu.pipeline_mode<synchronous>, transform_indices = @transform_2, window_bounds = array<i64: 8, 128>}, {transform_indices = @transform_3, window_bounds = array<i64: 1, 128>}]} {
    %c0 = arith.constant 0 : index
    %c0_0 = arith.constant 0 : index
    %0 = vector.load %arg1[%c0, %c0_0] : memref<128x32xf32, #tpu.memory_space<vmem>>, vector<128x32xf32>
    %1 = arith.truncf %0 : vector<128x32xf32> to vector<128x32xbf16>
    %c0_1 = arith.constant 0 : index
    %c0_2 = arith.constant 0 : index
    %2 = vector.load %arg2[%c0_1, %c0_2] : memref<512x128xbf16, #tpu.memory_space<vmem>>, vector<32x128xbf16>
    %cst = arith.constant dense<0.000000e+00> : vector<128x128xf32>
    %3 = tpu.matmul %1, %2, %cst {dimension_numbers = #tpu.dot_dimension_numbers<[1], [0], [0], [1], [0, 0, 1, 1], [], []>} : vector<128x32xbf16>, vector<32x128xbf16>, vector<128x128xf32> -> vector<128x128xf32>
    %c0_3 = arith.constant 0 : index
    %c0_4 = arith.constant 0 : index
    %4 = vector.load %arg3[%c0_3, %c0_4] : memref<8x128xf32, #tpu.memory_space<vmem>>, vector<1x128xf32>
    %5 = vector.broadcast %4 : vector<1x128xf32> to vector<128x128xf32>
    %6 = arith.addf %3, %5 : vector<128x128xf32>
    %cst_5 = arith.constant 0.000000e+00 : f32
    %7 = vector.broadcast %cst_5 : f32 to vector<128x128xf32>
    %8 = arith.maximumf %6, %7 : vector<128x128xf32>
    %9 = arith.truncf %8 : vector<128x128xf32> to vector<128x128xbf16>
    %c128 = arith.constant 128 : index
    %c0_6 = arith.constant 0 : index
    %10 = vector.load %arg2[%c128, %c0_6] : memref<512x128xbf16, #tpu.memory_space<vmem>>, vector<128x128xbf16>
    %cst_7 = arith.constant dense<0.000000e+00> : vector<128x128xf32>
    %11 = tpu.matmul %9, %10, %cst_7 {dimension_numbers = #tpu.dot_dimension_numbers<[1], [0], [0], [1], [0, 0, 1, 1], [], []>} : vector<128x128xbf16>, vector<128x128xbf16>, vector<128x128xf32> -> vector<128x128xf32>
    %cst_8 = arith.constant 0.000000e+00 : f32
    %12 = vector.broadcast %cst_8 : f32 to vector<128x128xf32>
    %13 = arith.maximumf %11, %12 : vector<128x128xf32>
    %14 = arith.truncf %13 : vector<128x128xf32> to vector<128x128xbf16>
    %c256 = arith.constant 256 : index
    %c0_9 = arith.constant 0 : index
    %15 = vector.load %arg2[%c256, %c0_9] : memref<512x128xbf16, #tpu.memory_space<vmem>>, vector<128x128xbf16>
    %cst_10 = arith.constant dense<0.000000e+00> : vector<128x128xf32>
    %16 = tpu.matmul %14, %15, %cst_10 {dimension_numbers = #tpu.dot_dimension_numbers<[1], [0], [0], [1], [0, 0, 1, 1], [], []>} : vector<128x128xbf16>, vector<128x128xbf16>, vector<128x128xf32> -> vector<128x128xf32>
    %cst_11 = arith.constant 0.000000e+00 : f32
    %17 = vector.broadcast %cst_11 : f32 to vector<128x128xf32>
    %18 = arith.maximumf %16, %17 : vector<128x128xf32>
    %19 = arith.truncf %18 : vector<128x128xf32> to vector<128x128xbf16>
    %c384 = arith.constant 384 : index
    %c0_12 = arith.constant 0 : index
    %20 = vector.load %arg2[%c384, %c0_12] : memref<512x128xbf16, #tpu.memory_space<vmem>>, vector<128x128xbf16>
    %cst_13 = arith.constant dense<0.000000e+00> : vector<128x128xf32>
    %21 = tpu.matmul %19, %20, %cst_13 {dimension_numbers = #tpu.dot_dimension_numbers<[1], [0], [0], [1], [0, 0, 1, 1], [], []>} : vector<128x128xbf16>, vector<128x128xbf16>, vector<128x128xf32> -> vector<128x128xf32>
    %cst_14 = arith.constant 0.000000e+00 : f32
    %22 = vector.broadcast %cst_14 : f32 to vector<128x128xf32>
    %23 = arith.maximumf %21, %22 : vector<128x128xf32>
    %24 = arith.truncf %23 : vector<128x128xf32> to vector<128x128xbf16>
    %c1 = arith.constant 1 : index
    %c0_15 = arith.constant 0 : index
    %25 = vector.load %arg3[%c1, %c0_15] : memref<8x128xf32, #tpu.memory_space<vmem>>, vector<1x128xf32>
    %26 = arith.truncf %25 : vector<1x128xf32> to vector<1x128xbf16>
    %cst_16 = arith.constant dense<0.000000e+00> : vector<1x128xf32>
    %27 = tpu.matmul %26, %24, %cst_16 {dimension_numbers = #tpu.dot_dimension_numbers<[1], [1], [0], [0], [0, 0, 1, 0], [], []>} : vector<1x128xbf16>, vector<128x128xbf16>, vector<1x128xf32> -> vector<1x128xf32>
    %c0_17 = arith.constant 0 : index
    %c0_18 = arith.constant 0 : index
    %28 = vector.load %arg4[%c0_17, %c0_18] : memref<1x128xf32, #tpu.memory_space<vmem>>, vector<1x128xf32>
    tpu.vector_store %arg4[%c0_17, %c0_18], %27 {strides = array<i32>} : memref<1x128xf32, #tpu.memory_space<vmem>>, vector<1x128xf32>,
    return
  }
  func.func @transform_0(%arg0: i32) -> (i32, i32) {
    %c0_i32 = arith.constant 0 : i32
    %c0_i32_0 = arith.constant 0 : i32
    return %arg0, %c0_i32 : i32, i32
  }
  func.func @transform_1(%arg0: i32) -> (i32, i32) {
    %c0_i32 = arith.constant 0 : i32
    %c0_i32_0 = arith.constant 0 : i32
    %c0_i32_1 = arith.constant 0 : i32
    return %c0_i32, %c0_i32_0 : i32, i32
  }
  func.func @transform_2(%arg0: i32) -> (i32, i32) {
    %c0_i32 = arith.constant 0 : i32
    %c0_i32_0 = arith.constant 0 : i32
    %c0_i32_1 = arith.constant 0 : i32
    return %c0_i32, %c0_i32_0 : i32, i32
  }
  func.func @transform_3(%arg0: i32) -> (i32, i32) {
    %c0_i32 = arith.constant 0 : i32
    %c0_i32_0 = arith.constant 0 : i32
    return %c0_i32, %arg0 : i32, i32
  }
}

</mosaic_0001>

<llo_original>
// kernel: bigger_network_forward.1
$region0: #{bigger_network_forward.1}
  #allocation0 [shape = 'u32[]', space=smem, size = 0x4, offset = 0x4, fixed_abs, tag = 'smem constant byte address 0x4 - core index']
  #allocation1 [shape = 'u32[144,128]{1,0:T(1,128)}', space=vmem, size = 0x12000, scoped, tag = 'internal scratch']
  %s0 = inlined_call_operand.vmem [shape: f32[128,32], index: 0, kind: input, shape index: {}]
  %s1 = inlined_call_operand.hbm [shape: bf16[512,128], index: 1, kind: input, shape index: {}]
  %s2 = inlined_call_operand.vmem [shape: f32[8,128], index: 2, kind: input, shape index: {}]
  %s3 = inlined_call_operand.vmem [shape: f32[1,128], index: 3, kind: output, shape index: {}]
  %s4 = sld [smem:[#allocation0]]
  $region26: #{bigger_network_forward.1} parent=0
    _
  %s6 = ssub.s32 1, %s4
  %s7 = scalar_select 0, %s6, %s4
  $region1: #{bigger_network_forward.1} parent=0
    #allocation2 [shape = 'u8[131072]{0}', space=vmem, size = 0x20000, scoped, tag = 'input window, operand 1, single buffered']
    #allocation3 [shape = 's32[1]{0}', space=sflag, size = 0x4, scoped, tag = 'scoped memory for bigger_network_forward.1']
    %8 = vsyncpa [#allocation3], 0
    // Predicated region
    $region2: #{bigger_network_forward.1} parent=1 // pred_check
      _
    $region3: #{bigger_network_forward.1} parent=1 // pred_check_branch
      %10 = sbr.rel (0) target = $region5
    $region4: #{bigger_network_forward.1} parent=1 // pred_region
      _
    $region5: #{bigger_network_forward.1} parent=1 // pred_fallthru
      _
    // Predicated region
    $region6: #{bigger_network_forward.1} parent=1 // pred_check
      _
    $region7: #{bigger_network_forward.1} parent=1 // pred_check_branch
      %12 = sbr.rel (0) target = $region9
    $region8: #{bigger_network_forward.1} parent=1 // pred_region
      %s14 = ssub.s32 4096, 4096
      %15 = vsyncadd [#allocation3], %s14
      %s16 = sshll.u32 [#allocation2], 4
      %s17 = int_to_ptr.vmem [resolvable:$true] %s16
      %22 = dma.hbm_to_vmem [thread:$0]  %s1, 4096, %s17, [#allocation3], 64, 64, 4
    $region9: #{bigger_network_forward.1} parent=1 // pred_fallthru
      _
    // Predicated region
    $region10: #{bigger_network_forward.1} parent=1 // pred_check
      _
    $region11: #{bigger_network_forward.1} parent=1 // pred_check_branch
      %24 = sbr.rel (0) target = $region13
    $region12: #{bigger_network_forward.1} parent=1 // pred_region
      _
    $region13: #{bigger_network_forward.1} parent=1 // pred_fallthru
      _
    // Predicated region
    $region14: #{bigger_network_forward.1} parent=1 // pred_check
      _
    $region15: #{bigger_network_forward.1} parent=1 // pred_check_branch
      %26 = sbr.rel (0) target = $region17
    $region16: #{bigger_network_forward.1} parent=1 // pred_region
      %27 = dma.done [#allocation3], 4096
    $region17: #{bigger_network_forward.1} parent=1 // pred_fallthru
      _
    %v29 = vld [vmem:[%s0] sm:$0xff]
    %v30 = vld [vmem:[%s0 + $0x8] sm:$0xff]
    %v31 = vld [vmem:[%s0 + $0x10] sm:$0xff]
    %v32 = vld [vmem:[%s0 + $0x18] sm:$0xff]
    %v33 = vld [vmem:[%s0 + $0x20] sm:$0xff]
    %v34 = vld [vmem:[%s0 + $0x28] sm:$0xff]
    %v35 = vld [vmem:[%s0 + $0x30] sm:$0xff]
    %v36 = vld [vmem:[%s0 + $0x38] sm:$0xff]
    %v37 = vld [vmem:[%s0 + $0x40] sm:$0xff]
    %v38 = vld [vmem:[%s0 + $0x48] sm:$0xff]
    %v39 = vld [vmem:[%s0 + $0x50] sm:$0xff]
    %v40 = vld [vmem:[%s0 + $0x58] sm:$0xff]
    %v41 = vld [vmem:[%s0 + $0x60] sm:$0xff]
    %v42 = vld [vmem:[%s0 + $0x68] sm:$0xff]
    %v43 = vld [vmem:[%s0 + $0x70] sm:$0xff]
    %v44 = vld [vmem:[%s0 + $0x78] sm:$0xff]
    %v45 = vpack.c.bf16 %v30, %v29
    %v46 = vpack.c.bf16 %v32, %v31
    %v47 = vpack.c.bf16 %v34, %v33
    %v48 = vpack.c.bf16 %v36, %v35
    %v49 = vpack.c.bf16 %v38, %v37
    %v50 = vpack.c.bf16 %v40, %v39
    %v51 = vpack.c.bf16 %v42, %v41
    %v52 = vpack.c.bf16 %v44, %v43
    %v53 = vld [vmem:[#allocation2] sm:$0xf]
    %v54 = vld [vmem:[#allocation2 + $0x4] sm:$0xf]
    %v55 = vld [vmem:[#allocation2 + $0x8] sm:$0xf]
    %v56 = vld [vmem:[#allocation2 + $0xc] sm:$0xf]
    %v57 = vld [vmem:[%s2] sm:$0x1]
    %v58 = vlaneseq
    %v59 = vshrl.u32 %v58, 7
    %v60 = vsub.s32 0, %v59
    %v61 = vrot.slane %v57, %v60
    %v66 = vunpack.c.l.b16 %v53
    %v67 = vunpack.c.l.b16 %v54
    %v68 = vunpack.c.l.b16 %v55
    %v69 = vunpack.c.l.b16 %v56
    %v70 = vpack.c.b16 %v67, %v66
    %v71 = vpack.c.b16 %v69, %v68
    %vm74 = vcmask 261120
    %v76 = vsel %vm74, %v45, 0
    %v79 = vsel %vm74, %v46, 0
    %v82 = vsel %vm74, %v47, 0
    %v85 = vsel %vm74, %v48, 0
    %v88 = vsel %vm74, %v49, 0
    %v91 = vsel %vm74, %v50, 0
    %v94 = vsel %vm74, %v51, 0
    %v97 = vsel %vm74, %v52, 0
    %99 = vmatprep.subr.bf16.mxu0 0
    %100 = vmatpush1.bf16.msra.mxu0 0
    %101 = vmatprep.subr.bf16.mxu0 0
    %102 = vmatpush1.bf16.msra.mxu0 0
    %103 = vmatprep.subr.bf16.mxu0 0
    %104 = vmatpush1.bf16.msra.mxu0 0
    %105 = vmatprep.subr.bf16.mxu0 0
    %106 = vmatpush1.bf16.msra.mxu0 0
    %107 = vmatprep.subr.bf16.mxu0 0
    %108 = vmatpush1.bf16.msra.mxu0 0
    %109 = vmatprep.subr.bf16.mxu0 0
    %110 = vmatpush1.bf16.msra.mxu0 0
    %111 = vmatprep.subr.bf16.mxu0 0
    %112 = vmatpush1.bf16.msra.mxu0 %v71
    %113 = vmatprep.subr.bf16.mxu0 0
    %114 = vmatpush1.bf16.msra.mxu0 %v70
    %115 = vmatprep.subr.bf16.mxu0 0
    %116 = vmatpush2.bf16.msra.mxu0 0
    %117 = vmatprep.subr.bf16.mxu0 0
    %118 = vmatpush2.bf16.msra.mxu0 0
    %119 = vmatprep.subr.bf16.mxu0 0
    %120 = vmatpush2.bf16.msra.mxu0 0
    %121 = vmatprep.subr.bf16.mxu0 0
    %122 = vmatpush2.bf16.msra.mxu0 0
    %123 = vmatprep.subr.bf16.mxu0 0
    %124 = vmatpush2.bf16.msra.mxu0 0
    %125 = vmatprep.subr.bf16.mxu0 0
    %126 = vmatpush2.bf16.msra.mxu0 0
    %127 = vmatprep.subr.bf16.mxu0 0
    %128 = vmatpush2.bf16.msra.mxu0 0
    %129 = vmatprep.subr.bf16.mxu0 0
    %130 = vmatpush2.bf16.msra.mxu0 0
    %131 = vmatprep.mubr.bf16.mxu0 0
    %132 = vmatmul.mubr.bf16.gmra.mxu0 %v76
    %v133 = vpop.f32.mrf.mxu0
    %v134 = vadd.f32 %v61, %v133
    %v135 = vpop.f32.mrf.mxu0
    %v136 = vpop.f32.mrf.mxu0
    %v137 = vadd.f32 %v61, %v136
    %v138 = vpop.f32.mrf.mxu0
    %139 = vmatprep.mubr.bf16.mxu0 0
    %140 = vmatmul.mubr.bf16.gmra.mxu0 %v79
    %v141 = vpop.f32.mrf.mxu0
    %v142 = vadd.f32 %v61, %v141
    %v143 = vpop.f32.mrf.mxu0
    %v144 = vpop.f32.mrf.mxu0
    %v145 = vadd.f32 %v61, %v144
    %v146 = vpop.f32.mrf.mxu0
    %147 = vmatprep.mubr.bf16.mxu0 0
    %148 = vmatmul.mubr.bf16.gmra.mxu0 %v82
    %v149 = vpop.f32.mrf.mxu0
    %v150 = vadd.f32 %v61, %v149
    %v151 = vpop.f32.mrf.mxu0
    %v152 = vpop.f32.mrf.mxu0
    %v153 = vadd.f32 %v61, %v152
    %v154 = vpop.f32.mrf.mxu0
    %155 = vmatprep.mubr.bf16.mxu0 0
    %156 = vmatmul.mubr.bf16.gmra.mxu0 %v85
    %v157 = vpop.f32.mrf.mxu0
    %v158 = vadd.f32 %v61, %v157
    %v159 = vpop.f32.mrf.mxu0
    %v160 = vpop.f32.mrf.mxu0
    %v161 = vadd.f32 %v61, %v160
    %v162 = vpop.f32.mrf.mxu0
    %163 = vmatprep.mubr.bf16.mxu0 0
    %164 = vmatmul.mubr.bf16.gmra.mxu0 %v88
    %v165 = vpop.f32.mrf.mxu0
    %v166 = vadd.f32 %v61, %v165
    %v167 = vpop.f32.mrf.mxu0
    %v168 = vpop.f32.mrf.mxu0
    %v169 = vadd.f32 %v61, %v168
    %v170 = vpop.f32.mrf.mxu0
    %171 = vmatprep.mubr.bf16.mxu0 0
    %172 = vmatmul.mubr.bf16.gmra.mxu0 %v91
    %v173 = vpop.f32.mrf.mxu0
    %v174 = vadd.f32 %v61, %v173
    %v175 = vpop.f32.mrf.mxu0
    %v176 = vpop.f32.mrf.mxu0
    %v177 = vadd.f32 %v61, %v176
    %v178 = vpop.f32.mrf.mxu0
    %179 = vmatprep.mubr.bf16.mxu0 0
    %180 = vmatmul.mubr.bf16.gmra.mxu0 %v94
    %v181 = vpop.f32.mrf.mxu0
    %v182 = vadd.f32 %v61, %v181
    %v183 = vpop.f32.mrf.mxu0
    %v184 = vpop.f32.mrf.mxu0
    %v185 = vadd.f32 %v61, %v184
    %v186 = vpop.f32.mrf.mxu0
    %187 = vmatprep.mubr.bf16.mxu0 0
    %188 = vmatmul.mubr.bf16.gmra.mxu0 %v97
    %v189 = vpop.f32.mrf.mxu0
    %v190 = vadd.f32 %v61, %v189
    %v191 = vpop.f32.mrf.mxu0
    %v192 = vpop.f32.mrf.mxu0
    %v193 = vadd.f32 %v61, %v192
    %v194 = vpop.f32.mrf.mxu0
    %195 = vdwg.mxu0
    %v196 = vmax.f32 %v134, 0.0
    %v197 = vmax.f32 %v137, 0.0
    %v198 = vmax.f32 %v142, 0.0
    %v199 = vmax.f32 %v145, 0.0
    %v200 = vmax.f32 %v150, 0.0
    %v201 = vmax.f32 %v153, 0.0
    %v202 = vmax.f32 %v158, 0.0
    %v203 = vmax.f32 %v161, 0.0
    %v204 = vmax.f32 %v166, 0.0
    %v205 = vmax.f32 %v169, 0.0
    %v206 = vmax.f32 %v174, 0.0
    %v207 = vmax.f32 %v177, 0.0
    %v208 = vmax.f32 %v182, 0.0
    %v209 = vmax.f32 %v185, 0.0
    %v210 = vmax.f32 %v190, 0.0
    %v211 = vmax.f32 %v193, 0.0
    %v212 = vpack.c.bf16 %v197, %v196
    %v213 = vpack.c.bf16 %v199, %v198
    %v214 = vpack.c.bf16 %v201, %v200
    %v215 = vpack.c.bf16 %v203, %v202
    %v216 = vpack.c.bf16 %v205, %v204
    %v217 = vpack.c.bf16 %v207, %v206
    %v218 = vpack.c.bf16 %v209, %v208
    %v219 = vpack.c.bf16 %v211, %v210
    %v220 = vld [vmem:[#allocation2 + $0x40] sm:$0xf]
    %v221 = vld [vmem:[#allocation2 + $0x44] sm:$0xf]
    %v222 = vld [vmem:[#allocation2 + $0x48] sm:$0xf]
    %v223 = vld [vmem:[#allocation2 + $0x4c] sm:$0xf]
    %v224 = vld [vmem:[#allocation2 + $0x50] sm:$0xf]
    %v225 = vld [vmem:[#allocation2 + $0x54] sm:$0xf]
    %v226 = vld [vmem:[#allocation2 + $0x58] sm:$0xf]
    %v227 = vld [vmem:[#allocation2 + $0x5c] sm:$0xf]
    %v228 = vld [vmem:[#allocation2 + $0x60] sm:$0xf]
    %v229 = vld [vmem:[#allocation2 + $0x64] sm:$0xf]
    %v230 = vld [vmem:[#allocation2 + $0x68] sm:$0xf]
    %v231 = vld [vmem:[#allocation2 + $0x6c] sm:$0xf]
    %v232 = vld [vmem:[#allocation2 + $0x70] sm:$0xf]
    %v233 = vld [vmem:[#allocation2 + $0x74] sm:$0xf]
    %v234 = vld [vmem:[#allocation2 + $0x78] sm:$0xf]
    %v235 = vld [vmem:[#allocation2 + $0x7c] sm:$0xf]
    %v252 = vunpack.c.l.b16 %v220
    %v253 = vunpack.c.l.b16 %v221
    %v254 = vunpack.c.l.b16 %v222
    %v255 = vunpack.c.l.b16 %v223
    %v256 = vunpack.c.l.b16 %v224
    %v257 = vunpack.c.l.b16 %v225
    %v258 = vunpack.c.l.b16 %v226
    %v259 = vunpack.c.l.b16 %v227
    %v260 = vunpack.c.l.b16 %v228
    %v261 = vunpack.c.l.b16 %v229
    %v262 = vunpack.c.l.b16 %v230
    %v263 = vunpack.c.l.b16 %v231
    %v264 = vunpack.c.l.b16 %v232
    %v265 = vunpack.c.l.b16 %v233
    %v266 = vunpack.c.l.b16 %v234
    %v267 = vunpack.c.l.b16 %v235
    %v268 = vpack.c.b16 %v253, %v252
    %v269 = vpack.c.b16 %v255, %v254
    %v270 = vpack.c.b16 %v257, %v256
    %v271 = vpack.c.b16 %v259, %v258
    %v272 = vpack.c.b16 %v261, %v260
    %v273 = vpack.c.b16 %v263, %v262
    %v274 = vpack.c.b16 %v265, %v264
    %v275 = vpack.c.b16 %v267, %v266
    %284 = vmatprep.subr.bf16.mxu0 0
    %285 = vmatpush1.bf16.msra.mxu0 %v275
    %286 = vmatprep.subr.bf16.mxu0 0
    %287 = vmatpush1.bf16.msra.mxu0 %v274
    %288 = vmatprep.subr.bf16.mxu0 0
    %289 = vmatpush1.bf16.msra.mxu0 %v273
    %290 = vmatprep.subr.bf16.mxu0 0
    %291 = vmatpush1.bf16.msra.mxu0 %v272
    %292 = vmatprep.subr.bf16.mxu0 0
    %293 = vmatpush1.bf16.msra.mxu0 %v271
    %294 = vmatprep.subr.bf16.mxu0 0
    %295 = vmatpush1.bf16.msra.mxu0 %v270
    %296 = vmatprep.subr.bf16.mxu0 0
    %297 = vmatpush1.bf16.msra.mxu0 %v269
    %298 = vmatprep.subr.bf16.mxu0 0
    %299 = vmatpush1.bf16.msra.mxu0 %v268
    %300 = vmatprep.subr.bf16.mxu0 0
    %301 = vmatpush2.bf16.msra.mxu0 0
    %302 = vmatprep.subr.bf16.mxu0 0
    %303 = vmatpush2.bf16.msra.mxu0 0
    %304 = vmatprep.subr.bf16.mxu0 0
    %305 = vmatpush2.bf16.msra.mxu0 0
    %306 = vmatprep.subr.bf16.mxu0 0
    %307 = vmatpush2.bf16.msra.mxu0 0
    %308 = vmatprep.subr.bf16.mxu0 0
    %309 = vmatpush2.bf16.msra.mxu0 0
    %310 = vmatprep.subr.bf16.mxu0 0
    %311 = vmatpush2.bf16.msra.mxu0 0
    %312 = vmatprep.subr.bf16.mxu0 0
    %313 = vmatpush2.bf16.msra.mxu0 0
    %314 = vmatprep.subr.bf16.mxu0 0
    %315 = vmatpush2.bf16.msra.mxu0 0
    %316 = vmatprep.mubr.bf16.mxu0 0
    %317 = vmatmul.mubr.bf16.gmra.mxu0 %v212
    %v318 = vpop.f32.mrf.mxu0
    %v319 = vadd.f32 0.0, %v318
    %v320 = vpop.f32.mrf.mxu0
    %v321 = vpop.f32.mrf.mxu0
    %v322 = vadd.f32 0.0, %v321
    %v323 = vpop.f32.mrf.mxu0
    %324 = vmatprep.mubr.bf16.mxu0 0
    %325 = vmatmul.mubr.bf16.gmra.mxu0 %v213
    %v326 = vpop.f32.mrf.mxu0
    %v327 = vadd.f32 0.0, %v326
    %v328 = vpop.f32.mrf.mxu0
    %v329 = vpop.f32.mrf.mxu0
    %v330 = vadd.f32 0.0, %v329
    %v331 = vpop.f32.mrf.mxu0
    %332 = vmatprep.mubr.bf16.mxu0 0
    %333 = vmatmul.mubr.bf16.gmra.mxu0 %v214
    %v334 = vpop.f32.mrf.mxu0
    %v335 = vadd.f32 0.0, %v334
    %v336 = vpop.f32.mrf.mxu0
    %v337 = vpop.f32.mrf.mxu0
    %v338 = vadd.f32 0.0, %v337
    %v339 = vpop.f32.mrf.mxu0
    %340 = vmatprep.mubr.bf16.mxu0 0
    %341 = vmatmul.mubr.bf16.gmra.mxu0 %v215
    %v342 = vpop.f32.mrf.mxu0
    %v343 = vadd.f32 0.0, %v342
    %v344 = vpop.f32.mrf.mxu0
    %v345 = vpop.f32.mrf.mxu0
    %v346 = vadd.f32 0.0, %v345
    %v347 = vpop.f32.mrf.mxu0
    %348 = vmatprep.mubr.bf16.mxu0 0
    %349 = vmatmul.mubr.bf16.gmra.mxu0 %v216
    %v350 = vpop.f32.mrf.mxu0
    %v351 = vadd.f32 0.0, %v350
    %v352 = vpop.f32.mrf.mxu0
    %v353 = vpop.f32.mrf.mxu0
    %v354 = vadd.f32 0.0, %v353
    %v355 = vpop.f32.mrf.mxu0
    %356 = vmatprep.mubr.bf16.mxu0 0
    %357 = vmatmul.mubr.bf16.gmra.mxu0 %v217
    %v358 = vpop.f32.mrf.mxu0
    %v359 = vadd.f32 0.0, %v358
    %v360 = vpop.f32.mrf.mxu0
    %v361 = vpop.f32.mrf.mxu0
    %v362 = vadd.f32 0.0, %v361
    %v363 = vpop.f32.mrf.mxu0
    %364 = vmatprep.mubr.bf16.mxu0 0
    %365 = vmatmul.mubr.bf16.gmra.mxu0 %v218
    %v366 = vpop.f32.mrf.mxu0
    %v367 = vadd.f32 0.0, %v366
    %v368 = vpop.f32.mrf.mxu0
    %v369 = vpop.f32.mrf.mxu0
    %v370 = vadd.f32 0.0, %v369
    %v371 = vpop.f32.mrf.mxu0
    %372 = vmatprep.mubr.bf16.mxu0 0
    %373 = vmatmul.mubr.bf16.gmra.mxu0 %v219
    %v374 = vpop.f32.mrf.mxu0
    %v375 = vadd.f32 0.0, %v374
    %v376 = vpop.f32.mrf.mxu0
    %v377 = vpop.f32.mrf.mxu0
    %v378 = vadd.f32 0.0, %v377
    %v379 = vpop.f32.mrf.mxu0
    %380 = vdwg.mxu0
    %v381 = vmax.f32 %v319, 0.0
    %v382 = vmax.f32 %v322, 0.0
    %v383 = vmax.f32 %v327, 0.0
    %v384 = vmax.f32 %v330, 0.0
    %v385 = vmax.f32 %v335, 0.0
    %v386 = vmax.f32 %v338, 0.0
    %v387 = vmax.f32 %v343, 0.0
    %v388 = vmax.f32 %v346, 0.0
    %v389 = vmax.f32 %v351, 0.0
    %v390 = vmax.f32 %v354, 0.0
    %v391 = vmax.f32 %v359, 0.0
    %v392 = vmax.f32 %v362, 0.0
    %v393 = vmax.f32 %v367, 0.0
    %v394 = vmax.f32 %v370, 0.0
    %v395 = vmax.f32 %v375, 0.0
    %v396 = vmax.f32 %v378, 0.0
    %v397 = vpack.c.bf16 %v382, %v381
    %v398 = vpack.c.bf16 %v384, %v383
    %v399 = vpack.c.bf16 %v386, %v385
    %v400 = vpack.c.bf16 %v388, %v387
    %v401 = vpack.c.bf16 %v390, %v389
    %v402 = vpack.c.bf16 %v392, %v391
    %v403 = vpack.c.bf16 %v394, %v393
    %v404 = vpack.c.bf16 %v396, %v395
    %v405 = vld [vmem:[#allocation2 + $0x80] sm:$0xf]
    %v406 = vld [vmem:[#allocation2 + $0x84] sm:$0xf]
    %v407 = vld [vmem:[#allocation2 + $0x88] sm:$0xf]
    %v408 = vld [vmem:[#allocation2 + $0x8c] sm:$0xf]
    %v409 = vld [vmem:[#allocation2 + $0x90] sm:$0xf]
    %v410 = vld [vmem:[#allocation2 + $0x94] sm:$0xf]
    %v411 = vld [vmem:[#allocation2 + $0x98] sm:$0xf]
    %v412 = vld [vmem:[#allocation2 + $0x9c] sm:$0xf]
    %v413 = vld [vmem:[#allocation2 + $0xa0] sm:$0xf]
    %v414 = vld [vmem:[#allocation2 + $0xa4] sm:$0xf]
    %v415 = vld [vmem:[#allocation2 + $0xa8] sm:$0xf]
    %v416 = vld [vmem:[#allocation2 + $0xac] sm:$0xf]
    %v417 = vld [vmem:[#allocation2 + $0xb0] sm:$0xf]
    %v418 = vld [vmem:[#allocation2 + $0xb4] sm:$0xf]
    %v419 = vld [vmem:[#allocation2 + $0xb8] sm:$0xf]
    %v420 = vld [vmem:[#allocation2 + $0xbc] sm:$0xf]
    %v437 = vunpack.c.l.b16 %v405
    %v438 = vunpack.c.l.b16 %v406
    %v439 = vunpack.c.l.b16 %v407
    %v440 = vunpack.c.l.b16 %v408
    %v441 = vunpack.c.l.b16 %v409
    %v442 = vunpack.c.l.b16 %v410
    %v443 = vunpack.c.l.b16 %v411
    %v444 = vunpack.c.l.b16 %v412
    %v445 = vunpack.c.l.b16 %v413
    %v446 = vunpack.c.l.b16 %v414
    %v447 = vunpack.c.l.b16 %v415
    %v448 = vunpack.c.l.b16 %v416
    %v449 = vunpack.c.l.b16 %v417
    %v450 = vunpack.c.l.b16 %v418
    %v451 = vunpack.c.l.b16 %v419
    %v452 = vunpack.c.l.b16 %v420
    %v453 = vpack.c.b16 %v438, %v437
    %v454 = vpack.c.b16 %v440, %v439
    %v455 = vpack.c.b16 %v442, %v441
    %v456 = vpack.c.b16 %v444, %v443
    %v457 = vpack.c.b16 %v446, %v445
    %v458 = vpack.c.b16 %v448, %v447
    %v459 = vpack.c.b16 %v450, %v449
    %v460 = vpack.c.b16 %v452, %v451
    %469 = vmatprep.subr.bf16.mxu0 0
    %470 = vmatpush1.bf16.msra.mxu0 %v460
    %471 = vmatprep.subr.bf16.mxu0 0
    %472 = vmatpush1.bf16.msra.mxu0 %v459
    %473 = vmatprep.subr.bf16.mxu0 0
    %474 = vmatpush1.bf16.msra.mxu0 %v458
    %475 = vmatprep.subr.bf16.mxu0 0
    %476 = vmatpush1.bf16.msra.mxu0 %v457
    %477 = vmatprep.subr.bf16.mxu0 0
    %478 = vmatpush1.bf16.msra.mxu0 %v456
    %479 = vmatprep.subr.bf16.mxu0 0
    %480 = vmatpush1.bf16.msra.mxu0 %v455
    %481 = vmatprep.subr.bf16.mxu0 0
    %482 = vmatpush1.bf16.msra.mxu0 %v454
    %483 = vmatprep.subr.bf16.mxu0 0
    %484 = vmatpush1.bf16.msra.mxu0 %v453
    %485 = vmatprep.subr.bf16.mxu0 0
    %486 = vmatpush2.bf16.msra.mxu0 0
    %487 = vmatprep.subr.bf16.mxu0 0
    %488 = vmatpush2.bf16.msra.mxu0 0
    %489 = vmatprep.subr.bf16.mxu0 0
    %490 = vmatpush2.bf16.msra.mxu0 0
    %491 = vmatprep.subr.bf16.mxu0 0
    %492 = vmatpush2.bf16.msra.mxu0 0
    %493 = vmatprep.subr.bf16.mxu0 0
    %494 = vmatpush2.bf16.msra.mxu0 0
    %495 = vmatprep.subr.bf16.mxu0 0
    %496 = vmatpush2.bf16.msra.mxu0 0
    %497 = vmatprep.subr.bf16.mxu0 0
    %498 = vmatpush2.bf16.msra.mxu0 0
    %499 = vmatprep.subr.bf16.mxu0 0
    %500 = vmatpush2.bf16.msra.mxu0 0
    %501 = vmatprep.mubr.bf16.mxu0 0
    %502 = vmatmul.mubr.bf16.gmra.mxu0 %v397
    %v503 = vpop.f32.mrf.mxu0
    %v504 = vadd.f32 0.0, %v503
    %v505 = vpop.f32.mrf.mxu0
    %v506 = vpop.f32.mrf.mxu0
    %v507 = vadd.f32 0.0, %v506
    %v508 = vpop.f32.mrf.mxu0
    %509 = vmatprep.mubr.bf16.mxu0 0
    %510 = vmatmul.mubr.bf16.gmra.mxu0 %v398
    %v511 = vpop.f32.mrf.mxu0
    %v512 = vadd.f32 0.0, %v511
    %v513 = vpop.f32.mrf.mxu0
    %v514 = vpop.f32.mrf.mxu0
    %v515 = vadd.f32 0.0, %v514
    %v516 = vpop.f32.mrf.mxu0
    %517 = vmatprep.mubr.bf16.mxu0 0
    %518 = vmatmul.mubr.bf16.gmra.mxu0 %v399
    %v519 = vpop.f32.mrf.mxu0
    %v520 = vadd.f32 0.0, %v519
    %v521 = vpop.f32.mrf.mxu0
    %v522 = vpop.f32.mrf.mxu0
    %v523 = vadd.f32 0.0, %v522
    %v524 = vpop.f32.mrf.mxu0
    %525 = vmatprep.mubr.bf16.mxu0 0
    %526 = vmatmul.mubr.bf16.gmra.mxu0 %v400
    %v527 = vpop.f32.mrf.mxu0
    %v528 = vadd.f32 0.0, %v527
    %v529 = vpop.f32.mrf.mxu0
    %v530 = vpop.f32.mrf.mxu0
    %v531 = vadd.f32 0.0, %v530
    %v532 = vpop.f32.mrf.mxu0
    %533 = vmatprep.mubr.bf16.mxu0 0
    %534 = vmatmul.mubr.bf16.gmra.mxu0 %v401
    %v535 = vpop.f32.mrf.mxu0
    %v536 = vadd.f32 0.0, %v535
    %v537 = vpop.f32.mrf.mxu0
    %v538 = vpop.f32.mrf.mxu0
    %v539 = vadd.f32 0.0, %v538
    %v540 = vpop.f32.mrf.mxu0
    %541 = vmatprep.mubr.bf16.mxu0 0
    %542 = vmatmul.mubr.bf16.gmra.mxu0 %v402
    %v543 = vpop.f32.mrf.mxu0
    %v544 = vadd.f32 0.0, %v543
    %v545 = vpop.f32.mrf.mxu0
    %v546 = vpop.f32.mrf.mxu0
    %v547 = vadd.f32 0.0, %v546
    %v548 = vpop.f32.mrf.mxu0
    %549 = vmatprep.mubr.bf16.mxu0 0
    %550 = vmatmul.mubr.bf16.gmra.mxu0 %v403
    %v551 = vpop.f32.mrf.mxu0
    %v552 = vadd.f32 0.0, %v551
    %v553 = vpop.f32.mrf.mxu0
    %v554 = vpop.f32.mrf.mxu0
    %v555 = vadd.f32 0.0, %v554
    %v556 = vpop.f32.mrf.mxu0
    %557 = vmatprep.mubr.bf16.mxu0 0
    %558 = vmatmul.mubr.bf16.gmra.mxu0 %v404
    %v559 = vpop.f32.mrf.mxu0
    %v560 = vadd.f32 0.0, %v559
    %v561 = vpop.f32.mrf.mxu0
    %v562 = vpop.f32.mrf.mxu0
    %v563 = vadd.f32 0.0, %v562
    %v564 = vpop.f32.mrf.mxu0
    %565 = vdwg.mxu0
    %v566 = vmax.f32 %v504, 0.0
    %v567 = vmax.f32 %v507, 0.0
    %v568 = vmax.f32 %v512, 0.0
    %v569 = vmax.f32 %v515, 0.0
    %v570 = vmax.f32 %v520, 0.0
    %v571 = vmax.f32 %v523, 0.0
    %v572 = vmax.f32 %v528, 0.0
    %v573 = vmax.f32 %v531, 0.0
    %v574 = vmax.f32 %v536, 0.0
    %v575 = vmax.f32 %v539, 0.0
    %v576 = vmax.f32 %v544, 0.0
    %v577 = vmax.f32 %v547, 0.0
    %v578 = vmax.f32 %v552, 0.0
    %v579 = vmax.f32 %v555, 0.0
    %v580 = vmax.f32 %v560, 0.0
    %v581 = vmax.f32 %v563, 0.0
    %v582 = vpack.c.bf16 %v567, %v566
    %v583 = vpack.c.bf16 %v569, %v568
    %v584 = vpack.c.bf16 %v571, %v570
    %v585 = vpack.c.bf16 %v573, %v572
    %v586 = vpack.c.bf16 %v575, %v574
    %v587 = vpack.c.bf16 %v577, %v576
    %v588 = vpack.c.bf16 %v579, %v578
    %v589 = vpack.c.bf16 %v581, %v580
    %v590 = vld [vmem:[#allocation2 + $0xc0] sm:$0xf]
    %v591 = vld [vmem:[#allocation2 + $0xc4] sm:$0xf]
    %v592 = vld [vmem:[#allocation2 + $0xc8] sm:$0xf]
    %v593 = vld [vmem:[#allocation2 + $0xcc] sm:$0xf]
    %v594 = vld [vmem:[#allocation2 + $0xd0] sm:$0xf]
    %v595 = vld [vmem:[#allocation2 + $0xd4] sm:$0xf]
    %v596 = vld [vmem:[#allocation2 + $0xd8] sm:$0xf]
    %v597 = vld [vmem:[#allocation2 + $0xdc] sm:$0xf]
    %v598 = vld [vmem:[#allocation2 + $0xe0] sm:$0xf]
    %v599 = vld [vmem:[#allocation2 + $0xe4] sm:$0xf]
    %v600 = vld [vmem:[#allocation2 + $0xe8] sm:$0xf]
    %v601 = vld [vmem:[#allocation2 + $0xec] sm:$0xf]
    %v602 = vld [vmem:[#allocation2 + $0xf0] sm:$0xf]
    %v603 = vld [vmem:[#allocation2 + $0xf4] sm:$0xf]
    %v604 = vld [vmem:[#allocation2 + $0xf8] sm:$0xf]
    %v605 = vld [vmem:[#allocation2 + $0xfc] sm:$0xf]
    %v622 = vunpack.c.l.b16 %v590
    %v623 = vunpack.c.l.b16 %v591
    %v624 = vunpack.c.l.b16 %v592
    %v625 = vunpack.c.l.b16 %v593
    %v626 = vunpack.c.l.b16 %v594
    %v627 = vunpack.c.l.b16 %v595
    %v628 = vunpack.c.l.b16 %v596
    %v629 = vunpack.c.l.b16 %v597
    %v630 = vunpack.c.l.b16 %v598
    %v631 = vunpack.c.l.b16 %v599
    %v632 = vunpack.c.l.b16 %v600
    %v633 = vunpack.c.l.b16 %v601
    %v634 = vunpack.c.l.b16 %v602
    %v635 = vunpack.c.l.b16 %v603
    %v636 = vunpack.c.l.b16 %v604
    %v637 = vunpack.c.l.b16 %v605
    %v638 = vpack.c.b16 %v623, %v622
    %v639 = vpack.c.b16 %v625, %v624
    %v640 = vpack.c.b16 %v627, %v626
    %v641 = vpack.c.b16 %v629, %v628
    %v642 = vpack.c.b16 %v631, %v630
    %v643 = vpack.c.b16 %v633, %v632
    %v644 = vpack.c.b16 %v635, %v634
    %v645 = vpack.c.b16 %v637, %v636
    %654 = vmatprep.subr.bf16.mxu0 0
    %655 = vmatpush1.bf16.msra.mxu0 %v645
    %656 = vmatprep.subr.bf16.mxu0 0
    %657 = vmatpush1.bf16.msra.mxu0 %v644
    %658 = vmatprep.subr.bf16.mxu0 0
    %659 = vmatpush1.bf16.msra.mxu0 %v643
    %660 = vmatprep.subr.bf16.mxu0 0
    %661 = vmatpush1.bf16.msra.mxu0 %v642
    %662 = vmatprep.subr.bf16.mxu0 0
    %663 = vmatpush1.bf16.msra.mxu0 %v641
    %664 = vmatprep.subr.bf16.mxu0 0
    %665 = vmatpush1.bf16.msra.mxu0 %v640
    %666 = vmatprep.subr.bf16.mxu0 0
    %667 = vmatpush1.bf16.msra.mxu0 %v639
    %668 = vmatprep.subr.bf16.mxu0 0
    %669 = vmatpush1.bf16.msra.mxu0 %v638
    %670 = vmatprep.subr.bf16.mxu0 0
    %671 = vmatpush2.bf16.msra.mxu0 0
    %672 = vmatprep.subr.bf16.mxu0 0
    %673 = vmatpush2.bf16.msra.mxu0 0
    %674 = vmatprep.subr.bf16.mxu0 0
    %675 = vmatpush2.bf16.msra.mxu0 0
    %676 = vmatprep.subr.bf16.mxu0 0
    %677 = vmatpush2.bf16.msra.mxu0 0
    %678 = vmatprep.subr.bf16.mxu0 0
    %679 = vmatpush2.bf16.msra.mxu0 0
    %680 = vmatprep.subr.bf16.mxu0 0
    %681 = vmatpush2.bf16.msra.mxu0 0
    %682 = vmatprep.subr.bf16.mxu0 0
    %683 = vmatpush2.bf16.msra.mxu0 0
    %684 = vmatprep.subr.bf16.mxu0 0
    %685 = vmatpush2.bf16.msra.mxu0 0
    %686 = vmatprep.mubr.bf16.mxu0 0
    %687 = vmatmul.mubr.bf16.gmra.mxu0 %v582
    %v688 = vpop.f32.mrf.mxu0
    %v689 = vadd.f32 0.0, %v688
    %v690 = vpop.f32.mrf.mxu0
    %v691 = vpop.f32.mrf.mxu0
    %v692 = vadd.f32 0.0, %v691
    %v693 = vpop.f32.mrf.mxu0
    %694 = vmatprep.mubr.bf16.mxu0 0
    %695 = vmatmul.mubr.bf16.gmra.mxu0 %v583
    %v696 = vpop.f32.mrf.mxu0
    %v697 = vadd.f32 0.0, %v696
    %v698 = vpop.f32.mrf.mxu0
    %v699 = vpop.f32.mrf.mxu0
    %v700 = vadd.f32 0.0, %v699
    %v701 = vpop.f32.mrf.mxu0
    %702 = vmatprep.mubr.bf16.mxu0 0
    %703 = vmatmul.mubr.bf16.gmra.mxu0 %v584
    %v704 = vpop.f32.mrf.mxu0
    %v705 = vadd.f32 0.0, %v704
    %v706 = vpop.f32.mrf.mxu0
    %v707 = vpop.f32.mrf.mxu0
    %v708 = vadd.f32 0.0, %v707
    %v709 = vpop.f32.mrf.mxu0
    %710 = vmatprep.mubr.bf16.mxu0 0
    %711 = vmatmul.mubr.bf16.gmra.mxu0 %v585
    %v712 = vpop.f32.mrf.mxu0
    %v713 = vadd.f32 0.0, %v712
    %v714 = vpop.f32.mrf.mxu0
    %v715 = vpop.f32.mrf.mxu0
    %v716 = vadd.f32 0.0, %v715
    %v717 = vpop.f32.mrf.mxu0
    %718 = vmatprep.mubr.bf16.mxu0 0
    %719 = vmatmul.mubr.bf16.gmra.mxu0 %v586
    %v720 = vpop.f32.mrf.mxu0
    %v721 = vadd.f32 0.0, %v720
    %v722 = vpop.f32.mrf.mxu0
    %v723 = vpop.f32.mrf.mxu0
    %v724 = vadd.f32 0.0, %v723
    %v725 = vpop.f32.mrf.mxu0
    %726 = vmatprep.mubr.bf16.mxu0 0
    %727 = vmatmul.mubr.bf16.gmra.mxu0 %v587
    %v728 = vpop.f32.mrf.mxu0
    %v729 = vadd.f32 0.0, %v728
    %v730 = vpop.f32.mrf.mxu0
    %v731 = vpop.f32.mrf.mxu0
    %v732 = vadd.f32 0.0, %v731
    %v733 = vpop.f32.mrf.mxu0
    %734 = vmatprep.mubr.bf16.mxu0 0
    %735 = vmatmul.mubr.bf16.gmra.mxu0 %v588
    %v736 = vpop.f32.mrf.mxu0
    %v737 = vadd.f32 0.0, %v736
    %v738 = vpop.f32.mrf.mxu0
    %v739 = vpop.f32.mrf.mxu0
    %v740 = vadd.f32 0.0, %v739
    %v741 = vpop.f32.mrf.mxu0
    %742 = vmatprep.mubr.bf16.mxu0 0
    %743 = vmatmul.mubr.bf16.gmra.mxu0 %v589
    %v744 = vpop.f32.mrf.mxu0
    %v745 = vadd.f32 0.0, %v744
    %v746 = vpop.f32.mrf.mxu0
    %v747 = vpop.f32.mrf.mxu0
    %v748 = vadd.f32 0.0, %v747
    %v749 = vpop.f32.mrf.mxu0
    %750 = vdwg.mxu0
    %v751 = vmax.f32 %v689, 0.0
    %v752 = vmax.f32 %v692, 0.0
    %v753 = vmax.f32 %v697, 0.0
    %v754 = vmax.f32 %v700, 0.0
    %v755 = vmax.f32 %v705, 0.0
    %v756 = vmax.f32 %v708, 0.0
    %v757 = vmax.f32 %v713, 0.0
    %v758 = vmax.f32 %v716, 0.0
    %v759 = vmax.f32 %v721, 0.0
    %v760 = vmax.f32 %v724, 0.0
    %v761 = vmax.f32 %v729, 0.0
    %v762 = vmax.f32 %v732, 0.0
    %v763 = vmax.f32 %v737, 0.0
    %v764 = vmax.f32 %v740, 0.0
    %v765 = vmax.f32 %v745, 0.0
    %v766 = vmax.f32 %v748, 0.0
    %v767 = vpack.c.bf16 %v752, %v751
    %v768 = vpack.c.bf16 %v754, %v753
    %v769 = vpack.c.bf16 %v756, %v755
    %v770 = vpack.c.bf16 %v758, %v757
    %v771 = vpack.c.bf16 %v760, %v759
    %v772 = vpack.c.bf16 %v762, %v761
    %v773 = vpack.c.bf16 %v764, %v763
    %v774 = vpack.c.bf16 %v766, %v765
    %v775 = vld [vmem:[%s2 + $0x1] sm:$0x1]
    %v776 = vpack.c.bf16 %v775, %v775
    %777 = vmatprep.subr.bf16.mxu0 0
    %778 = vmatpush1.bf16.xpose.msra.mxu0 %v774
    %779 = vmatprep.subr.bf16.mxu0 0
    %780 = vmatpush1.bf16.xpose.msra.mxu0 %v773
    %781 = vmatprep.subr.bf16.mxu0 0
    %782 = vmatpush1.bf16.xpose.msra.mxu0 %v772
    %783 = vmatprep.subr.bf16.mxu0 0
    %784 = vmatpush1.bf16.xpose.msra.mxu0 %v771
    %785 = vmatprep.subr.bf16.mxu0 0
    %786 = vmatpush1.bf16.xpose.msra.mxu0 %v770
    %787 = vmatprep.subr.bf16.mxu0 0
    %788 = vmatpush1.bf16.xpose.msra.mxu0 %v769
    %789 = vmatprep.subr.bf16.mxu0 0
    %790 = vmatpush1.bf16.xpose.msra.mxu0 %v768
    %791 = vmatprep.subr.bf16.mxu0 0
    %792 = vmatpush1.bf16.xpose.msra.mxu0 %v767
    %793 = vmatprep.subr.bf16.mxu0 0
    %794 = vmatpush2.bf16.xpose.msra.mxu0 0
    %795 = vmatprep.subr.bf16.mxu0 0
    %796 = vmatpush2.bf16.xpose.msra.mxu0 0
    %797 = vmatprep.subr.bf16.mxu0 0
    %798 = vmatpush2.bf16.xpose.msra.mxu0 0
    %799 = vmatprep.subr.bf16.mxu0 0
    %800 = vmatpush2.bf16.xpose.msra.mxu0 0
    %801 = vmatprep.subr.bf16.mxu0 0
    %802 = vmatpush2.bf16.xpose.msra.mxu0 0
    %803 = vmatprep.subr.bf16.mxu0 0
    %804 = vmatpush2.bf16.xpose.msra.mxu0 0
    %805 = vmatprep.subr.bf16.mxu0 0
    %806 = vmatpush2.bf16.xpose.msra.mxu0 0
    %807 = vmatprep.subr.bf16.mxu0 0
    %808 = vmatpush2.bf16.xpose.msra.mxu0 0
    %809 = vmatprep.mubr.bf16.mxu0 0
    %810 = vmatmul.mubr.bf16.gmra.mxu0 %v776
    %v811 = vpop.f32.mrf.mxu0
    %v812 = vadd.f32 0.0, %v811
    %v813 = vpop.f32.mrf.mxu0
    %v814 = vpop.f32.mrf.mxu0
    %v815 = vpop.f32.mrf.mxu0
    %816 = vdwg.mxu0
    %817 = vst [vmem:[%s3] sm:$0x1] %v812
    // Predicated region
    $region18: #{bigger_network_forward.1} parent=1 // pred_check
      _
    $region19: #{bigger_network_forward.1} parent=1 // pred_check_branch
      %819 = sbr.rel (0) target = $region21
    $region20: #{bigger_network_forward.1} parent=1 // pred_region
      _
    $region21: #{bigger_network_forward.1} parent=1 // pred_fallthru
      _
    // Predicated region
    $region22: #{bigger_network_forward.1} parent=1 // pred_check
      _
    $region23: #{bigger_network_forward.1} parent=1 // pred_check_branch
      %821 = sbr.rel (0) target = $region25
    $region24: #{bigger_network_forward.1} parent=1 // pred_region
      _
    $region25: #{bigger_network_forward.1} parent=1 // pred_fallthru
      _
    %822 = vsyncpa [#allocation3], 1

</llo_original>
